<compile_context>
chip_gen: v5e
topology: v5e:2x2
jax: 0.10.0
libtpu: 0.0.40
codegen_flags: <defaults>
</compile_context>

<pallas_src>
import math

import jax
import jax.numpy as jnp
from jax.experimental import pallas as pl
from jax.experimental.pallas import tpu as pltpu

STATE_DIM = 16
ACTION_DIM = 4
HIDDEN = 64
BATCH = 8
ACTION_STD_INIT = 0.6

LANES = 128
INPUT_LANES = 32                     # packed input row width (full last dim)
BIAS_LANE = STATE_DIM                # 16: constant-1 lane (folds layer-1 bias)
ACT_OFFSET = STATE_DIM + 1           # 17: action lanes 17..20
LOGPROB_LANE = ACTION_DIM            # 4
VALUE_LANE = ACTION_DIM + 1          # 5
ENTROPY_LANE = ACTION_DIM + 2        # 6

SUBLANE = 16                         # bf16 sublane packing -> batch padding unit
MAX_BLOCK_B = 1024                   # batch-tile cap
SPLIT_THRESHOLD = 512                # above this, force >=2 grid steps (v7x megacore)

_LOG_2PI = math.log(2.0 * math.pi)


def actor_critic_kernel(x_ref, w_ref, c_ref, out_ref):
    """Fused actor+critic MLP, diag-Gaussian log_prob / entropy, critic value.

    x_ref  : (Bb, 32)  bf16  packed rows: state 0..15 | 1.0 @16 | action 17..20
    w_ref  : (384,128) bf16  rows [0:32)=W1(+bias row), [128:256)=W2, [256:384)=W3
    c_ref  : (8, 128)  f32   row0=b2, row1=b3(+folded consts), row2=inv_var@17..20,
                             row3=mean-lane mask, row4=logprob-lane mask
    out_ref: (Bb, 128) f32   lanes 0..3 mean | 4 logprob | 5 value | 6 entropy
    """
    x = x_ref[...]                                   # (Bb, 32) bf16
    consts = c_ref[...]                              # (8, 128) f32
    b2 = consts[0:1, :]
    b3 = consts[1:2, :]
    inv_var = consts[2:3, :INPUT_LANES]              # 1/var at action lanes, else 0
    mean_mask = consts[3:4, :]
    lp_mask = consts[4:5, :]

    w1 = w_ref[:INPUT_LANES, :]                      # (32, 128)
    w2 = w_ref[LANES:2 * LANES, :]                   # (128, 128)
    w3 = w_ref[2 * LANES:, :]                        # (128, 128)

    # Fused actor|critic hidden lanes (actor 0..63, critic 64..127); layer-1 bias is
    # folded into W1 via the constant-1 input lane.  bf16 operands, f32 accumulate.
    h1 = jnp.tanh(jnp.dot(x, w1, preferred_element_type=jnp.float32))
    h2 = jnp.tanh(jnp.dot(h1.astype(jnp.bfloat16), w2,
                          preferred_element_type=jnp.float32) + b2)
    y3 = jnp.dot(h2.astype(jnp.bfloat16), w3,
                 preferred_element_type=jnp.float32) + b3        # (Bb, 128) f32
    t3 = jnp.tanh(y3)

    # Mahalanobis term: W3 duplicates the actor head at the action-aligned lanes
    # 17..20 and inv_var is zero everywhere else, so this masked 32-lane reduction
    # is exact with no roll / lane select.
    diff = x.astype(jnp.float32) - t3[:, :INPUT_LANES]
    maha = jnp.sum(diff * diff * inv_var, axis=-1, keepdims=True)  # (Bb, 1)

    # Lane-dense packed output:
    #   lanes 0..3: mean (tanh head)   lane 4: logprob_const - 0.5*maha
    #   lane 5    : critic value       lane 6: entropy (constant folded into b3)
    out_ref[...] = y3 + mean_mask * (t3 - y3) - 0.5 * (lp_mask * maha)


def pack_params(params, action_var):
    """Pack the 12 Linear weights/biases + Gaussian constants into two resident
    slabs.  Call ONCE per parameter update and reuse across evaluate() calls
    (hoisted out of the per-call path)."""
    (aw1, ab1, aw2, ab2, aw3, ab3, cw1, cb1, cw2, cb2, cw3, cb3) = params

    w = jnp.zeros((3 * LANES, LANES), jnp.float32)
    # W1 rows 0..31: [aw1 | cw1]; bias row at BIAS_LANE; action rows 17..20 stay 0.
    w = w.at[:STATE_DIM, :HIDDEN].set(aw1)
    w = w.at[:STATE_DIM, HIDDEN:].set(cw1)
    w = w.at[BIAS_LANE, :HIDDEN].set(ab1[0])
    w = w.at[BIAS_LANE, HIDDEN:].set(cb1[0])
    # W2 rows 128..255: block-diag(aw2, cw2).
    w = w.at[LANES:LANES + HIDDEN, :HIDDEN].set(aw2)
    w = w.at[LANES + HIDDEN:2 * LANES, HIDDEN:].set(cw2)
    # W3 rows 256..383: actor head -> lanes 0..3 and (duplicated) 17..20,
    # critic head -> VALUE_LANE.
    w = w.at[2 * LANES:2 * LANES + HIDDEN, :ACTION_DIM].set(aw3)
    w = w.at[2 * LANES:2 * LANES + HIDDEN, ACT_OFFSET:ACT_OFFSET + ACTION_DIM].set(aw3)
    w = w.at[2 * LANES + HIDDEN:, VALUE_LANE].set(cw3[:, 0])
    w = w.astype(jnp.bfloat16)

    # Host-precomputed Gaussian constants (exact f32; no log/divide in the kernel).
    logdet = jnp.sum(jnp.log(action_var))
    logprob_const = -0.5 * (ACTION_DIM * _LOG_2PI + logdet)
    entropy_const = 0.5 * ACTION_DIM * (1.0 + _LOG_2PI) + 0.5 * logdet

    c = jnp.zeros((8, LANES), jnp.float32)
    c = c.at[0, :HIDDEN].set(ab2[0])
    c = c.at[0, HIDDEN:].set(cb2[0])
    c = c.at[1, :ACTION_DIM].set(ab3[0])
    c = c.at[1, ACT_OFFSET:ACT_OFFSET + ACTION_DIM].set(ab3[0])   # bias of duplicate head
    c = c.at[1, LOGPROB_LANE].set(logprob_const)
    c = c.at[1, VALUE_LANE].set(cb3[0, 0])
    c = c.at[1, ENTROPY_LANE].set(entropy_const)
    c = c.at[2, ACT_OFFSET:ACT_OFFSET + ACTION_DIM].set(1.0 / action_var)
    c = c.at[3, :ACTION_DIM].set(1.0)       # mean-lane mask
    c = c.at[4, LOGPROB_LANE].set(1.0)      # logprob-lane mask
    return w, c


def _round_up(x, m):
    return -(-x // m) * m


def _choose_tiling(batch):
    """Padded batch + batch tile: multiples of 16 (bf16 sublane packing), tiles
    capped at MAX_BLOCK_B, and >=2 grid steps for large batches so the 'parallel'
    batch axis shards across both v7x TensorCores."""
    bp = _round_up(max(batch, 1), SUBLANE)
    if bp <= SPLIT_THRESHOLD:
        return bp, bp                        # single step: per-step overhead dominates
    block = min(MAX_BLOCK_B, _round_up(-(-bp // 2), SUBLANE))
    bp = _round_up(bp, block)
    return bp, block


@jax.jit
def actor_critic_evaluate(state, action, w_packed, c_packed):
    """Returns (action_mean, action_logprobs, state_values, dist_entropy).

    `w_packed, c_packed = pack_params(...)` must be produced once per parameter
    set and reused; parameter packing is deliberately outside the per-call path."""
    batch = state.shape[0]
    bp, block_b = _choose_tiling(batch)

    # Tiny packed input slab (64 B/row); built under jit so it fuses with the launch.
    data = jnp.zeros((bp, INPUT_LANES), jnp.float32)
    data = data.at[:batch, :STATE_DIM].set(state)
    data = data.at[:batch, BIAS_LANE].set(1.0)
    data = data.at[:batch, ACT_OFFSET:ACT_OFFSET + ACTION_DIM].set(action)
    data = data.astype(jnp.bfloat16)

    out = pl.pallas_call(
        actor_critic_kernel,
        out_shape=jax.ShapeDtypeStruct((bp, LANES), jnp.float32),
        grid=(bp // block_b,),
        in_specs=[
            pl.BlockSpec((block_b, INPUT_LANES), lambda i: (i, 0)),
            pl.BlockSpec((3 * LANES, LANES), lambda i: (0, 0)),
            pl.BlockSpec((8, LANES), lambda i: (0, 0)),
        ],
        out_specs=pl.BlockSpec((block_b, LANES), lambda i: (i, 0)),
        compiler_params=pltpu.CompilerParams(
            dimension_semantics=("parallel",),
            vmem_limit_bytes=32 * 1024 * 1024),
    )(data, w_packed, c_packed)

    mean = out[:batch, :ACTION_DIM]
    logprob = out[:batch, LOGPROB_LANE]
    values = out[:batch, VALUE_LANE:VALUE_LANE + 1]
    entropy = out[:batch, ENTROPY_LANE]
    return mean, logprob, values, entropy


def init_params(key):
    """Deterministic init mimicking torch.nn.Linear (uniform +-1/sqrt(fan_in)),
    weights stored as [in, out]."""
    keys = jax.random.split(key, 12)

    def linear(kw, kb, fan_in, fan_out):
        bound = 1.0 / math.sqrt(fan_in)
        wgt = jax.random.uniform(kw, (fan_in, fan_out), jnp.float32, -bound, bound)
        b = jax.random.uniform(kb, (1, fan_out), jnp.float32, -bound, bound)
        return wgt, b

    aw1, ab1 = linear(keys[0], keys[1], STATE_DIM, HIDDEN)
    aw2, ab2 = linear(keys[2], keys[3], HIDDEN, HIDDEN)
    aw3, ab3 = linear(keys[4], keys[5], HIDDEN, ACTION_DIM)
    cw1, cb1 = linear(keys[6], keys[7], STATE_DIM, HIDDEN)
    cw2, cb2 = linear(keys[8], keys[9], HIDDEN, HIDDEN)
    cw3, cb3 = linear(keys[10], keys[11], HIDDEN, 1)
    return (aw1, ab1, aw2, ab2, aw3, ab3, cw1, cb1, cw2, cb2, cw3, cb3)


def reference_evaluate_f32(state, action, action_var, params):
    """Pure-f32 JAX reference mirroring the PyTorch module (continuous case)."""
    (aw1, ab1, aw2, ab2, aw3, ab3, cw1, cb1, cw2, cb2, cw3, cb3) = params
    h = jnp.tanh(state @ aw1 + ab1)
    h = jnp.tanh(h @ aw2 + ab2)
    mean = jnp.tanh(h @ aw3 + ab3)
    logdet = jnp.sum(jnp.log(action_var))
    diff = action - mean
    maha = jnp.sum(diff * diff / action_var[None, :], axis=-1)
    logprob = -0.5 * (maha + ACTION_DIM * _LOG_2PI + logdet)
    entropy = jnp.broadcast_to(0.5 * ACTION_DIM * (1.0 + _LOG_2PI) + 0.5 * logdet,
                               (state.shape[0],))
    c = jnp.tanh(state @ cw1 + cb1)
    c = jnp.tanh(c @ cw2 + cb2)
    values = c @ cw3 + cb3
    return mean, logprob, values, entropy


def reference_evaluate_bf16(state, action, action_var, params):
    """Reference with the SAME bf16 operand quantization as the kernel (bf16 matmul
    operands and layer-1 bias, f32 accumulation / f32 everywhere else).  Verifies the
    kernel's packing & fusion exactly, independent of the bf16-vs-f32 quantization."""
    (aw1, ab1, aw2, ab2, aw3, ab3, cw1, cb1, cw2, cb2, cw3, cb3) = params
    bf, f32 = jnp.bfloat16, jnp.float32
    q = lambda t: t.astype(bf)

    def mm(a, b):
        return jnp.dot(q(a), q(b), preferred_element_type=f32)

    s = q(state)
    h = jnp.tanh(mm(s, aw1) + q(ab1).astype(f32))
    h = jnp.tanh(mm(h, aw2) + ab2)
    mean = jnp.tanh(mm(h, aw3) + ab3)
    c = jnp.tanh(mm(s, cw1) + q(cb1).astype(f32))
    c = jnp.tanh(mm(c, cw2) + cb2)
    values = mm(c, cw3) + cb3
    logdet = jnp.sum(jnp.log(action_var))
    diff = q(action).astype(f32) - mean
    maha = jnp.sum(diff * diff / action_var[None, :], axis=-1)
    logprob = -0.5 * (maha + ACTION_DIM * _LOG_2PI + logdet)
    entropy = jnp.broadcast_to(0.5 * ACTION_DIM * (1.0 + _LOG_2PI) + 0.5 * logdet,
                               (state.shape[0],))
    return mean, logprob, values, entropy


if __name__ == "__main__":
    key = jax.random.PRNGKey(0)
    k_state, k_action, k_params = jax.random.split(key, 3)

    state = jax.random.normal(k_state, (BATCH, STATE_DIM), jnp.float32)
    action = jax.random.normal(k_action, (BATCH, ACTION_DIM), jnp.float32)
    action_var = jnp.full((ACTION_DIM,), ACTION_STD_INIT * ACTION_STD_INIT,
                          jnp.float32)
    params = init_params(k_params)

    # Pack once; reused across all evaluate() calls with fixed params.
    w_packed, c_packed = pack_params(params, action_var)

    mean, logprob, values, entropy = actor_critic_evaluate(
        state, action, w_packed, c_packed)
    jax.block_until_ready((mean, logprob, values, entropy))

    # Tier 1: exact-math check against a reference with identical bf16 operand
    # quantization -- verifies the lane packing / fusion itself.
    m1, lp1, v1, e1 = reference_evaluate_bf16(state, action, action_var, params)
    assert jnp.allclose(mean, m1, atol=2e-3, rtol=2e-3), "action_mean mismatch (matched)"
    assert jnp.allclose(values, v1, atol=2e-3, rtol=2e-3), "state_values mismatch (matched)"
    assert jnp.allclose(logprob, lp1, atol=5e-3, rtol=2e-3), "log_prob mismatch (matched)"
    assert jnp.allclose(entropy, e1, atol=1e-4), "entropy mismatch (matched)"

    # Tier 2: against the pure-f32 module reference; tolerance budgets the bf16
    # streaming quantization (logprob error is amplified by 1/var ~= 2.8 and
    # |action - mean|, per review).  Entropy is an exactly-folded constant.
    m0, lp0, v0, e0 = reference_evaluate_f32(state, action, action_var, params)
    assert jnp.allclose(mean, m0, atol=3e-2), "action_mean mismatch (f32 ref)"
    assert jnp.allclose(values, v0, atol=3e-2), "state_values mismatch (f32 ref)"
    assert jnp.allclose(logprob, lp0, atol=1e-1, rtol=2e-2), "log_prob mismatch (f32 ref)"
    assert jnp.allclose(entropy, e0, atol=1e-4), "entropy mismatch (f32 ref)"

    # TODO(synk): act()'s dist.sample() (host RNG) and the discrete Categorical
    # branch are not implemented; continuous evaluate() path only.
    print("KERNEL_OK")
</pallas_src>

<mosaic_0001>
module attributes {stable_mosaic.version = 11 : i64} {
  func.func @actor_critic_kernel(%arg0: i32, %arg1: memref<16x32xbf16, #tpu.memory_space<vmem>>, %arg2: memref<384x128xbf16, #tpu.memory_space<vmem>>, %arg3: memref<8x128xf32, #tpu.memory_space<vmem>>, %arg4: memref<16x128xf32, #tpu.memory_space<vmem>>) attributes {dimension_semantics = [#tpu.dimension_semantics<parallel>], iteration_bounds = array<i64: 1>, scalar_prefetch = 0 : i64, scratch_operands = 0 : i64, tpu.core_type = #tpu.core_type<tc>, window_params = [{transform_indices = @transform_0, window_bounds = array<i64: 16, 32>}, {pipeline_mode = #tpu.pipeline_mode<synchronous>, transform_indices = @transform_1, window_bounds = array<i64: 384, 128>}, {pipeline_mode = #tpu.pipeline_mode<synchronous>, transform_indices = @transform_2, window_bounds = array<i64: 8, 128>}, {transform_indices = @transform_3, window_bounds = array<i64: 16, 128>}]} {
    %c0 = arith.constant 0 : index
    %c0_0 = arith.constant 0 : index
    %0 = vector.load %arg1[%c0, %c0_0] : memref<16x32xbf16, #tpu.memory_space<vmem>>, vector<16x32xbf16>
    %c0_1 = arith.constant 0 : index
    %c0_2 = arith.constant 0 : index
    %1 = vector.load %arg3[%c0_1, %c0_2] : memref<8x128xf32, #tpu.memory_space<vmem>>, vector<8x128xf32>
    %2 = vector.extract_strided_slice %1 {offsets = [0, 0], sizes = [1, 128], strides = [1, 1]} : vector<8x128xf32> to vector<1x128xf32>
    %3 = vector.extract_strided_slice %1 {offsets = [1, 0], sizes = [1, 128], strides = [1, 1]} : vector<8x128xf32> to vector<1x128xf32>
    %4 = vector.extract_strided_slice %1 {offsets = [2, 0], sizes = [1, 32], strides = [1, 1]} : vector<8x128xf32> to vector<1x32xf32>
    %5 = vector.extract_strided_slice %1 {offsets = [3, 0], sizes = [1, 128], strides = [1, 1]} : vector<8x128xf32> to vector<1x128xf32>
    %6 = vector.extract_strided_slice %1 {offsets = [4, 0], sizes = [1, 128], strides = [1, 1]} : vector<8x128xf32> to vector<1x128xf32>
    %c0_3 = arith.constant 0 : index
    %c0_4 = arith.constant 0 : index
    %7 = vector.load %arg2[%c0_3, %c0_4] : memref<384x128xbf16, #tpu.memory_space<vmem>>, vector<32x128xbf16>
    %c128 = arith.constant 128 : index
    %c0_5 = arith.constant 0 : index
    %8 = vector.load %arg2[%c128, %c0_5] : memref<384x128xbf16, #tpu.memory_space<vmem>>, vector<128x128xbf16>
    %c256 = arith.constant 256 : index
    %c0_6 = arith.constant 0 : index
    %9 = vector.load %arg2[%c256, %c0_6] : memref<384x128xbf16, #tpu.memory_space<vmem>>, vector<128x128xbf16>
    %cst = arith.constant dense<0.000000e+00> : vector<16x128xf32>
    %10 = tpu.matmul %0, %7, %cst {dimension_numbers = #tpu.dot_dimension_numbers<[1], [0], [0], [1], [0, 0, 1, 1], [], []>} : vector<16x32xbf16>, vector<32x128xbf16>, vector<16x128xf32> -> vector<16x128xf32>
    %11 = math.tanh %10 : vector<16x128xf32>
    %12 = arith.truncf %11 : vector<16x128xf32> to vector<16x128xbf16>
    %cst_7 = arith.constant dense<0.000000e+00> : vector<16x128xf32>
    %13 = tpu.matmul %12, %8, %cst_7 {dimension_numbers = #tpu.dot_dimension_numbers<[1], [0], [0], [1], [0, 0, 1, 1], [], []>} : vector<16x128xbf16>, vector<128x128xbf16>, vector<16x128xf32> -> vector<16x128xf32>
    %14 = vector.broadcast %2 : vector<1x128xf32> to vector<16x128xf32>
    %15 = arith.addf %13, %14 : vector<16x128xf32>
    %16 = math.tanh %15 : vector<16x128xf32>
    %17 = arith.truncf %16 : vector<16x128xf32> to vector<16x128xbf16>
    %cst_8 = arith.constant dense<0.000000e+00> : vector<16x128xf32>
    %18 = tpu.matmul %17, %9, %cst_8 {dimension_numbers = #tpu.dot_dimension_numbers<[1], [0], [0], [1], [0, 0, 1, 1], [], []>} : vector<16x128xbf16>, vector<128x128xbf16>, vector<16x128xf32> -> vector<16x128xf32>
    %19 = vector.broadcast %3 : vector<1x128xf32> to vector<16x128xf32>
    %20 = arith.addf %18, %19 : vector<16x128xf32>
    %21 = math.tanh %20 : vector<16x128xf32>
    %22 = arith.extf %0 : vector<16x32xbf16> to vector<16x32xf32>
    %23 = vector.extract_strided_slice %21 {offsets = [0, 0], sizes = [16, 32], strides = [1, 1]} : vector<16x128xf32> to vector<16x32xf32>
    %24 = arith.subf %22, %23 : vector<16x32xf32>
    %25 = arith.mulf %24, %24 : vector<16x32xf32>
    %26 = vector.broadcast %4 : vector<1x32xf32> to vector<16x32xf32>
    %27 = arith.mulf %25, %26 : vector<16x32xf32>
    %cst_9 = arith.constant dense<0.000000e+00> : vector<16xf32>
    %28 = vector.multi_reduction <add>, %27, %cst_9 [1] : vector<16x32xf32> to vector<16xf32>
    %29 = vector.shape_cast %28 : vector<16xf32> to vector<16x1xf32>
    %30 = arith.subf %21, %20 : vector<16x128xf32>
    %31 = vector.broadcast %5 : vector<1x128xf32> to vector<16x128xf32>
    %32 = arith.mulf %31, %30 : vector<16x128xf32>
    %33 = arith.addf %20, %32 : vector<16x128xf32>
    %34 = vector.broadcast %6 : vector<1x128xf32> to vector<16x128xf32>
    %35 = vector.broadcast %29 : vector<16x1xf32> to vector<16x128xf32>
    %36 = arith.mulf %34, %35 : vector<16x128xf32>
    %cst_10 = arith.constant 5.000000e-01 : f32
    %37 = vector.broadcast %cst_10 : f32 to vector<16x128xf32>
    %38 = arith.mulf %37, %36 : vector<16x128xf32>
    %39 = arith.subf %33, %38 : vector<16x128xf32>
    %c0_11 = arith.constant 0 : index
    %c0_12 = arith.constant 0 : index
    %40 = vector.load %arg4[%c0_11, %c0_12] : memref<16x128xf32, #tpu.memory_space<vmem>>, vector<16x128xf32>
    tpu.vector_store %arg4[%c0_11, %c0_12], %39 {strides = array<i32>} : memref<16x128xf32, #tpu.memory_space<vmem>>, vector<16x128xf32>,
    return
  }
  func.func @transform_0(%arg0: i32) -> (i32, i32) {
    %c0_i32 = arith.constant 0 : i32
    %c0_i32_0 = arith.constant 0 : i32
    return %arg0, %c0_i32 : i32, i32
  }
  func.func @transform_1(%arg0: i32) -> (i32, i32) {
    %c0_i32 = arith.constant 0 : i32
    %c0_i32_0 = arith.constant 0 : i32
    %c0_i32_1 = arith.constant 0 : i32
    return %c0_i32, %c0_i32_0 : i32, i32
  }
  func.func @transform_2(%arg0: i32) -> (i32, i32) {
    %c0_i32 = arith.constant 0 : i32
    %c0_i32_0 = arith.constant 0 : i32
    %c0_i32_1 = arith.constant 0 : i32
    return %c0_i32, %c0_i32_0 : i32, i32
  }
  func.func @transform_3(%arg0: i32) -> (i32, i32) {
    %c0_i32 = arith.constant 0 : i32
    %c0_i32_0 = arith.constant 0 : i32
    return %arg0, %c0_i32 : i32, i32
  }
}

</mosaic_0001>

<llo_original>
// kernel: actor_critic_evaluate.1
$region0: #{actor_critic_evaluate.1}
  #allocation0 [shape = 'u32[]', space=smem, size = 0x4, offset = 0x4, fixed_abs, tag = 'smem constant byte address 0x4 - core index']
  #allocation1 [shape = 'u32[72,128]{1,0:T(1,128)}', space=vmem, size = 0x9000, scoped, tag = 'internal scratch']
  %s0 = inlined_call_operand.vmem [shape: bf16[16,32], index: 0, kind: input, shape index: {}]
  %s1 = inlined_call_operand.hbm [shape: bf16[384,128], index: 1, kind: input, shape index: {}]
  %s2 = inlined_call_operand.vmem [shape: f32[8,128], index: 2, kind: input, shape index: {}]
  %s3 = inlined_call_operand.vmem [shape: f32[16,128], index: 3, kind: output, shape index: {}]
  %s4 = sld [smem:[#allocation0]]
  $region26: #{actor_critic_evaluate.1} parent=0
    _
  %s6 = ssub.s32 1, %s4
  %s7 = scalar_select 0, %s6, %s4
  $region1: #{actor_critic_evaluate.1} parent=0
    #allocation2 [shape = 'u8[98304]{0}', space=vmem, size = 0x18000, scoped, tag = 'input window, operand 1, single buffered']
    #allocation3 [shape = 's32[1]{0}', space=sflag, size = 0x4, scoped, tag = 'scoped memory for actor_critic_evaluate.1']
    %8 = vsyncpa [#allocation3], 0
    // Predicated region
    $region2: #{actor_critic_evaluate.1} parent=1 // pred_check
      _
    $region3: #{actor_critic_evaluate.1} parent=1 // pred_check_branch
      %10 = sbr.rel (0) target = $region5
    $region4: #{actor_critic_evaluate.1} parent=1 // pred_region
      _
    $region5: #{actor_critic_evaluate.1} parent=1 // pred_fallthru
      _
    // Predicated region
    $region6: #{actor_critic_evaluate.1} parent=1 // pred_check
      _
    $region7: #{actor_critic_evaluate.1} parent=1 // pred_check_branch
      %12 = sbr.rel (0) target = $region9
    $region8: #{actor_critic_evaluate.1} parent=1 // pred_region
      %14 = vsyncadd [#allocation3], 0
      %s15 = sshll.u32 %s1, 4
      %s16 = int_to_ptr.hbm [resolvable:$true] %s15
      %s17 = sshll.u32 [#allocation2], 4
      %s18 = int_to_ptr.vmem [resolvable:$true] %s17
      %23 = dma.hbm_to_vmem [thread:$0]  %s16, 3072, %s18, [#allocation3], 64, 64, 4
    $region9: #{actor_critic_evaluate.1} parent=1 // pred_fallthru
      _
    // Predicated region
    $region10: #{actor_critic_evaluate.1} parent=1 // pred_check
      _
    $region11: #{actor_critic_evaluate.1} parent=1 // pred_check_branch
      %25 = sbr.rel (0) target = $region13
    $region12: #{actor_critic_evaluate.1} parent=1 // pred_region
      _
    $region13: #{actor_critic_evaluate.1} parent=1 // pred_fallthru
      _
    // Predicated region
    $region14: #{actor_critic_evaluate.1} parent=1 // pred_check
      _
    $region15: #{actor_critic_evaluate.1} parent=1 // pred_check_branch
      %27 = sbr.rel (0) target = $region17
    $region16: #{actor_critic_evaluate.1} parent=1 // pred_region
      %29 = dma.done [#allocation3], 3072
    $region17: #{actor_critic_evaluate.1} parent=1 // pred_fallthru
      _
    %v31 = vld [vmem:[%s0] sm:$0xf]
    %v32 = vld [vmem:[%s0 + $0x4] sm:$0xf]
    %v33 = vld [vmem:[%s2] sm:$0xff]
    %v34 = vld [vmem:[#allocation2] sm:$0xf]
    %v35 = vld [vmem:[#allocation2 + $0x4] sm:$0xf]
    %v36 = vld [vmem:[#allocation2 + $0x8] sm:$0xf]
    %v37 = vld [vmem:[#allocation2 + $0xc] sm:$0xf]
    %v38 = vld [vmem:[#allocation2 + $0x40] sm:$0xf]
    %v39 = vld [vmem:[#allocation2 + $0x44] sm:$0xf]
    %v40 = vld [vmem:[#allocation2 + $0x48] sm:$0xf]
    %v41 = vld [vmem:[#allocation2 + $0x4c] sm:$0xf]
    %v42 = vld [vmem:[#allocation2 + $0x50] sm:$0xf]
    %v43 = vld [vmem:[#allocation2 + $0x54] sm:$0xf]
    %v44 = vld [vmem:[#allocation2 + $0x58] sm:$0xf]
    %v45 = vld [vmem:[#allocation2 + $0x5c] sm:$0xf]
    %v46 = vld [vmem:[#allocation2 + $0x60] sm:$0xf]
    %v47 = vld [vmem:[#allocation2 + $0x64] sm:$0xf]
    %v48 = vld [vmem:[#allocation2 + $0x68] sm:$0xf]
    %v49 = vld [vmem:[#allocation2 + $0x6c] sm:$0xf]
    %v50 = vld [vmem:[#allocation2 + $0x70] sm:$0xf]
    %v51 = vld [vmem:[#allocation2 + $0x74] sm:$0xf]
    %v52 = vld [vmem:[#allocation2 + $0x78] sm:$0xf]
    %v53 = vld [vmem:[#allocation2 + $0x7c] sm:$0xf]
    %v54 = vld [vmem:[#allocation2 + $0x80] sm:$0xf]
    %v55 = vld [vmem:[#allocation2 + $0x84] sm:$0xf]
    %v56 = vld [vmem:[#allocation2 + $0x88] sm:$0xf]
    %v57 = vld [vmem:[#allocation2 + $0x8c] sm:$0xf]
    %v58 = vld [vmem:[#allocation2 + $0x90] sm:$0xf]
    %v59 = vld [vmem:[#allocation2 + $0x94] sm:$0xf]
    %v60 = vld [vmem:[#allocation2 + $0x98] sm:$0xf]
    %v61 = vld [vmem:[#allocation2 + $0x9c] sm:$0xf]
    %v62 = vld [vmem:[#allocation2 + $0xa0] sm:$0xf]
    %v63 = vld [vmem:[#allocation2 + $0xa4] sm:$0xf]
    %v64 = vld [vmem:[#allocation2 + $0xa8] sm:$0xf]
    %v65 = vld [vmem:[#allocation2 + $0xac] sm:$0xf]
    %v66 = vld [vmem:[#allocation2 + $0xb0] sm:$0xf]
    %v67 = vld [vmem:[#allocation2 + $0xb4] sm:$0xf]
    %v68 = vld [vmem:[#allocation2 + $0xb8] sm:$0xf]
    %v69 = vld [vmem:[#allocation2 + $0xbc] sm:$0xf]
    %v72 = vunpack.c.l.b16 %v31
    %v73 = vunpack.c.l.b16 %v32
    %v74 = vpack.c.b16 %v73, %v72
    %v79 = vunpack.c.l.b16 %v34
    %v80 = vunpack.c.l.b16 %v35
    %v81 = vunpack.c.l.b16 %v36
    %v82 = vunpack.c.l.b16 %v37
    %v83 = vpack.c.b16 %v80, %v79
    %v84 = vpack.c.b16 %v82, %v81
    %vm87 = vcmask 261120
    %v89 = vsel %vm87, %v74, 0
    %91 = vmatpush.bf16.msra.mxu0 0
    %92 = vmatpush.bf16.msra.mxu0 0
    %93 = vmatpush.bf16.msra.mxu0 0
    %94 = vmatpush.bf16.msra.mxu0 0
    %95 = vmatpush.bf16.msra.mxu0 0
    %96 = vmatpush.bf16.msra.mxu0 0
    %97 = vmatpush.bf16.msra.mxu0 %v84
    %98 = vmatpush.bf16.msra.mxu0 %v83
    %99 = vmatmul.bf16.gmra.mxu0 %v89
    %v100 = vpop.f32.mrf.mxu0
    %v101 = vadd.f32 0.0, %v100
    %v102 = vpop.f32.mrf.mxu0
    %v103 = vadd.f32 0.0, %v102
    %104 = vdwg.mxu0
    %v105 = vtanh.pop %v101
    %v106 = vtanh.pop %v103
    %v107 = vpack.c.bf16 %v106, %v105
    %v108 = vperm.slane %v33, 0
    %v125 = vunpack.c.l.b16 %v38
    %v126 = vunpack.c.l.b16 %v39
    %v127 = vunpack.c.l.b16 %v40
    %v128 = vunpack.c.l.b16 %v41
    %v129 = vunpack.c.l.b16 %v42
    %v130 = vunpack.c.l.b16 %v43
    %v131 = vunpack.c.l.b16 %v44
    %v132 = vunpack.c.l.b16 %v45
    %v133 = vunpack.c.l.b16 %v46
    %v134 = vunpack.c.l.b16 %v47
    %v135 = vunpack.c.l.b16 %v48
    %v136 = vunpack.c.l.b16 %v49
    %v137 = vunpack.c.l.b16 %v50
    %v138 = vunpack.c.l.b16 %v51
    %v139 = vunpack.c.l.b16 %v52
    %v140 = vunpack.c.l.b16 %v53
    %v141 = vpack.c.b16 %v126, %v125
    %v142 = vpack.c.b16 %v128, %v127
    %v143 = vpack.c.b16 %v130, %v129
    %v144 = vpack.c.b16 %v132, %v131
    %v145 = vpack.c.b16 %v134, %v133
    %v146 = vpack.c.b16 %v136, %v135
    %v147 = vpack.c.b16 %v138, %v137
    %v148 = vpack.c.b16 %v140, %v139
    %157 = vmatpush.bf16.msra.mxu0 %v148
    %158 = vmatpush.bf16.msra.mxu0 %v147
    %159 = vmatpush.bf16.msra.mxu0 %v146
    %160 = vmatpush.bf16.msra.mxu0 %v145
    %161 = vmatpush.bf16.msra.mxu0 %v144
    %162 = vmatpush.bf16.msra.mxu0 %v143
    %163 = vmatpush.bf16.msra.mxu0 %v142
    %164 = vmatpush.bf16.msra.mxu0 %v141
    %165 = vmatmul.bf16.gmra.mxu0 %v107
    %v166 = vpop.f32.mrf.mxu0
    %v167 = vadd.f32 %v108, %v166
    %v168 = vpop.f32.mrf.mxu0
    %v169 = vadd.f32 %v108, %v168
    %170 = vdwg.mxu0
    %v171 = vtanh.pop %v167
    %v172 = vtanh.pop %v169
    %v173 = vpack.c.bf16 %v172, %v171
    %v174 = vperm.slane %v33, 1
    %v191 = vunpack.c.l.b16 %v54
    %v192 = vunpack.c.l.b16 %v55
    %v193 = vunpack.c.l.b16 %v56
    %v194 = vunpack.c.l.b16 %v57
    %v195 = vunpack.c.l.b16 %v58
    %v196 = vunpack.c.l.b16 %v59
    %v197 = vunpack.c.l.b16 %v60
    %v198 = vunpack.c.l.b16 %v61
    %v199 = vunpack.c.l.b16 %v62
    %v200 = vunpack.c.l.b16 %v63
    %v201 = vunpack.c.l.b16 %v64
    %v202 = vunpack.c.l.b16 %v65
    %v203 = vunpack.c.l.b16 %v66
    %v204 = vunpack.c.l.b16 %v67
    %v205 = vunpack.c.l.b16 %v68
    %v206 = vunpack.c.l.b16 %v69
    %v207 = vpack.c.b16 %v192, %v191
    %v208 = vpack.c.b16 %v194, %v193
    %v209 = vpack.c.b16 %v196, %v195
    %v210 = vpack.c.b16 %v198, %v197
    %v211 = vpack.c.b16 %v200, %v199
    %v212 = vpack.c.b16 %v202, %v201
    %v213 = vpack.c.b16 %v204, %v203
    %v214 = vpack.c.b16 %v206, %v205
    %223 = vmatpush.bf16.msra.mxu0 %v214
    %224 = vmatpush.bf16.msra.mxu0 %v213
    %225 = vmatpush.bf16.msra.mxu0 %v212
    %226 = vmatpush.bf16.msra.mxu0 %v211
    %227 = vmatpush.bf16.msra.mxu0 %v210
    %228 = vmatpush.bf16.msra.mxu0 %v209
    %229 = vmatpush.bf16.msra.mxu0 %v208
    %230 = vmatpush.bf16.msra.mxu0 %v207
    %231 = vmatmul.bf16.gmra.mxu0 %v173
    %v232 = vpop.f32.mrf.mxu0
    %v233 = vadd.f32 %v174, %v232
    %v234 = vpop.f32.mrf.mxu0
    %v235 = vadd.f32 %v174, %v234
    %236 = vdwg.mxu0
    %v237 = vtanh.pop %v233
    %v238 = vtanh.pop %v235
    %v239 = vunpack.c.l.bf16 %v31
    %v240 = vunpack.c.l.bf16 %v32
    %v241 = vsub.f32 %v239, %v237
    %v242 = vsub.f32 %v240, %v238
    %v243 = vmul.f32 %v241, %v241
    %v244 = vmul.f32 %v242, %v242
    %v245 = vperm.slane %v33, 2
    %v246 = vmul.f32 %v243, %v245
    %v247 = vmul.f32 %v244, %v245
    %v248 = vsel %vm87, %v246, 0.0
    %249 = vadd.xlane.f32.xlu0 %v248
    %v250 = vpop.xlane.xlu0 %249
    %v251 = vsel %vm87, %v247, 0.0
    %252 = vadd.xlane.f32.xlu0 %v251
    %v253 = vpop.xlane.xlu0 %252
    %v254 = vsub.f32 %v237, %v233
    %v255 = vsub.f32 %v238, %v235
    %v256 = vperm.slane %v33, 3
    %v257 = vmul.f32 %v256, %v254
    %v258 = vmul.f32 %v256, %v255
    %v259 = vadd.f32 %v233, %v257
    %v260 = vadd.f32 %v235, %v258
    %v261 = vperm.slane %v33, 4
    %v262 = vmul.f32 %v261, %v250
    %v263 = vmul.f32 %v261, %v253
    %v264 = vmul.f32 %v262, 0.5
    %v265 = vmul.f32 %v263, 0.5
    %v266 = vsub.f32 %v259, %v264
    %v267 = vsub.f32 %v260, %v265
    %268 = vst [vmem:[%s3] sm:$0xff] %v266
    %269 = vst [vmem:[%s3 + $0x8] sm:$0xff] %v267
    // Predicated region
    $region18: #{actor_critic_evaluate.1} parent=1 // pred_check
      _
    $region19: #{actor_critic_evaluate.1} parent=1 // pred_check_branch
      %271 = sbr.rel (0) target = $region21
    $region20: #{actor_critic_evaluate.1} parent=1 // pred_region
      _
    $region21: #{actor_critic_evaluate.1} parent=1 // pred_fallthru
      _
    // Predicated region
    $region22: #{actor_critic_evaluate.1} parent=1 // pred_check
      _
    $region23: #{actor_critic_evaluate.1} parent=1 // pred_check_branch
      %273 = sbr.rel (0) target = $region25
    $region24: #{actor_critic_evaluate.1} parent=1 // pred_region
      _
    $region25: #{actor_critic_evaluate.1} parent=1 // pred_fallthru
      _
    %274 = vsyncpa [#allocation3], 1

</llo_original>
